<compile_context>
chip_gen: v7x
topology: tpu7x:2x2x1
jax: 0.10.0
libtpu: 0.0.40
codegen_flags: <defaults>
</compile_context>

<pallas_src>
import functools

import jax
import jax.numpy as jnp
from jax import lax
from jax.experimental import pallas as pl
from jax.experimental.pallas import tpu as pltpu


# ---------------------------------------------------------------------------
# Pallas kernels.
# ---------------------------------------------------------------------------
def _conv_stats_kernel(p_ref, w_ref, psum_ref, psq_ref):
    """Pass 1: z = patches @ W (fp32 accum); emit per-tile channel sum/sumsq."""
    z = jnp.dot(p_ref[...], w_ref[...], preferred_element_type=jnp.float32)
    psum_ref[...] = jnp.sum(z, axis=0, keepdims=True)[None]        # (1,1,Cw)
    psq_ref[...] = jnp.sum(z * z, axis=0, keepdims=True)[None]     # (1,1,Cw)


def _conv_bn_relu_kernel(p_ref, w_ref, scale_ref, shift_ref, o_ref):
    """Pass 2: recompute z, apply folded BatchNorm affine + ReLU (fp32 epilogue)."""
    z = jnp.dot(p_ref[...], w_ref[...], preferred_element_type=jnp.float32)
    o_ref[...] = jnp.maximum(z * scale_ref[...] + shift_ref[...], 0.0)


# ---------------------------------------------------------------------------
# Layout glue (no arithmetic hot path here).
# ---------------------------------------------------------------------------
def _round_up(x, m):
    return ((x + m - 1) // m) * m


def im2col(x_nhwc, ksize=3, stride=1, pad=1):
    N, H, W, C = x_nhwc.shape
    xp = jnp.pad(x_nhwc, ((0, 0), (pad, pad), (pad, pad), (0, 0)))
    Ho = (H + 2 * pad - ksize) // stride + 1
    Wo = (W + 2 * pad - ksize) // stride + 1
    cols = []
    for kh in range(ksize):
        for kw in range(ksize):
            patch = lax.slice(
                xp,
                (0, kh, kw, 0),
                (N, kh + stride * (Ho - 1) + 1, kw + stride * (Wo - 1) + 1, C),
                (1, stride, stride, 1),
            )
            cols.append(patch)  # K order is (kh, kw, cin)
    patches = jnp.concatenate(cols, axis=-1)
    return patches.reshape(N * Ho * Wo, ksize * ksize * C), (N, Ho, Wo)


def _torch_weight_to_matmul(w_oihw):
    # (Cout, Cin, kh, kw) -> (kh, kw, Cin, Cout) -> (9*Cin, Cout)
    Cout = w_oihw.shape[0]
    return jnp.transpose(w_oihw, (2, 3, 1, 0)).reshape(-1, Cout)


# ---------------------------------------------------------------------------
# ResBlock_Discriminator forward: Conv2d -> BatchNorm2d (batch stats) -> ReLU.
# ---------------------------------------------------------------------------
def resblock_discriminator_forward(x_nchw, params, *, stride, eps=1e-5,
                                   tm_target=512):
    x = jnp.transpose(x_nchw, (0, 2, 3, 1))                 # NCHW -> NHWC
    patches, (N, Ho, Wo) = im2col(x, ksize=3, stride=stride, pad=1)
    w_mat = _torch_weight_to_matmul(params["w"])            # (K, Cout) fp32
    M, K = patches.shape
    Cout = w_mat.shape[1]

    # -- lane-dense "wide" packing: pack several output pixels per row so the
    #    kernel output minor dim is a full 128 lanes.
    pack = 128 // Cout if (Cout <= 128 and 128 % Cout == 0) else 1
    Kw, Cw = pack * K, pack * Cout

    # -- tile over wide rows; keep >=2 grid steps when possible so that
    #    ("parallel",) can span both v7x TensorCores.
    Mw = _round_up(M, pack) // pack
    tm = max(8, (min(tm_target, Mw) // 8) * 8)
    if Mw // tm < 2 and Mw >= 16:
        tm = max(8, ((Mw // 2) // 8) * 8)
    Mw_p = _round_up(Mw, tm)
    n_tiles = Mw_p // tm
    Mp = Mw_p * pack

    if Mp != M:
        patches = jnp.pad(patches, ((0, Mp - M), (0, 0)))
    patches_w = patches.reshape(Mw_p, Kw).astype(jnp.bfloat16)   # free reshape

    # block-diagonal weight: column block q holds the channels of packed pixel q
    w_wide = jnp.zeros((Kw, Cw), jnp.float32)
    for q in range(pack):
        w_wide = w_wide.at[q * K:(q + 1) * K, q * Cout:(q + 1) * Cout].set(w_mat)
    w_wide = w_wide.astype(jnp.bfloat16)

    parallel = pltpu.CompilerParams(dimension_semantics=("parallel",))
    p_spec = pl.BlockSpec((tm, Kw), lambda i: (i, 0))
    w_spec = pl.BlockSpec((Kw, Cw), lambda i: (0, 0))

    # ---- pass 1: per-tile channel sums / sums of squares (batch statistics).
    psum, psq = pl.pallas_call(
        _conv_stats_kernel,
        out_shape=(jax.ShapeDtypeStruct((n_tiles, 1, Cw), jnp.float32),
                   jax.ShapeDtypeStruct((n_tiles, 1, Cw), jnp.float32)),
        grid=(n_tiles,),
        in_specs=[p_spec, w_spec],
        out_specs=(pl.BlockSpec((1, 1, Cw), lambda i: (i, 0, 0)),
                   pl.BlockSpec((1, 1, Cw), lambda i: (i, 0, 0))),
        compiler_params=parallel,
    )(patches_w, w_wide)

    # Fold pack replicas + tiles.  Padded rows are all-zero so they contribute
    # nothing; the conv bias is omitted because it cancels exactly under BN.
    ch_sum = psum.sum(axis=(0, 1)).reshape(pack, Cout).sum(axis=0)
    ch_sq = psq.sum(axis=(0, 1)).reshape(pack, Cout).sum(axis=0)
    mean = ch_sum / M
    var = jnp.maximum(ch_sq / M - mean * mean, 0.0)          # biased, as in BN
    scale = params["gamma"] * lax.rsqrt(var + eps)
    shift = params["beta"] - mean * scale
    scale_w = jnp.tile(scale, pack).reshape(1, Cw).astype(jnp.float32)
    shift_w = jnp.tile(shift, pack).reshape(1, Cw).astype(jnp.float32)

    # ---- pass 2: recompute matmul, fused BN affine + ReLU, lane-dense stores.
    out_wide = pl.pallas_call(
        _conv_bn_relu_kernel,
        out_shape=jax.ShapeDtypeStruct((Mw_p, Cw), jnp.float32),
        grid=(n_tiles,),
        in_specs=[p_spec, w_spec,
                  pl.BlockSpec((1, Cw), lambda i: (0, 0)),
                  pl.BlockSpec((1, Cw), lambda i: (0, 0))],
        out_specs=pl.BlockSpec((tm, Cw), lambda i: (i, 0)),
        compiler_params=parallel,
    )(patches_w, w_wide, scale_w, shift_w)

    out = out_wide.reshape(Mp, Cout)          # free (contiguous) un-packing
    if Mp != M:                               # no-op for tile-aligned shapes
        out = out[:M]
    out = out.reshape(N, Ho, Wo, Cout)
    return jnp.transpose(out, (0, 3, 1, 2))   # NHWC -> NCHW


# ---------------------------------------------------------------------------
# Pure-JAX reference (PyTorch training-mode forward: conv+bias, batch-stat BN,
# ReLU) — correctness check only.
# ---------------------------------------------------------------------------
def ref_forward(x_nchw, params, *, stride, eps=1e-5):
    dn = ("NCHW", "OIHW", "NCHW")
    z = lax.conv_general_dilated(x_nchw, params["w"], (stride, stride),
                                 ((1, 1), (1, 1)), dimension_numbers=dn)
    z = z + params["b"].reshape(1, -1, 1, 1)
    mean = jnp.mean(z, axis=(0, 2, 3), keepdims=True)
    var = jnp.var(z, axis=(0, 2, 3), keepdims=True)     # biased, like BN
    zn = (z - mean) * lax.rsqrt(var + eps)
    zn = zn * params["gamma"].reshape(1, -1, 1, 1) + params["beta"].reshape(1, -1, 1, 1)
    return jnp.maximum(zn, 0.0)


if __name__ == "__main__":
    key = jax.random.PRNGKey(0)
    k_x, k_w, k_b, k_g, k_be = jax.random.split(key, 5)

    N, Cin, H, W = 2, 4, 16, 16
    Cout, stride = 64, 2
    x = jax.random.normal(k_x, (N, Cin, H, W), dtype=jnp.float32)

    params = {
        "w": jax.random.normal(k_w, (Cout, Cin, 3, 3), jnp.float32) * 0.1,
        "b": jax.random.normal(k_b, (Cout,), jnp.float32) * 0.1,   # cancels under BN
        "gamma": 1.0 + 0.1 * jax.random.normal(k_g, (Cout,), jnp.float32),
        "beta": 0.1 * jax.random.normal(k_be, (Cout,), jnp.float32),
    }

    fwd = jax.jit(functools.partial(resblock_discriminator_forward, stride=stride))
    out = jax.block_until_ready(fwd(x, params))

    expected = jax.block_until_ready(ref_forward(x, params, stride=stride))
    assert out.shape == (N, Cout, H // stride, W // stride), out.shape
    assert jnp.allclose(out, expected, rtol=2e-2, atol=3e-2), (
        float(jnp.max(jnp.abs(out - expected))))

    print("KERNEL_OK")
</pallas_src>

<mosaic_0001>
module attributes {stable_mosaic.version = 11 : i64} {
  func.func @_conv_stats_kernel(%arg0: i32, %arg1: memref<32x72xbf16, #tpu.memory_space<vmem>>, %arg2: memref<72x128xbf16, #tpu.memory_space<vmem>>, %arg3: memref<1x1x128xf32, #tpu.memory_space<vmem>>, %arg4: memref<1x1x128xf32, #tpu.memory_space<vmem>>) attributes {dimension_semantics = [#tpu.dimension_semantics<parallel>], iteration_bounds = array<i64: 2>, scalar_prefetch = 0 : i64, scratch_operands = 0 : i64, tpu.core_type = #tpu.core_type<tc>, window_params = [{transform_indices = @transform_0, window_bounds = array<i64: 32, 72>}, {pipeline_mode = #tpu.pipeline_mode<synchronous>, transform_indices = @transform_1, window_bounds = array<i64: 72, 128>}, {transform_indices = @transform_2, window_bounds = array<i64: 1, 1, 128>}, {transform_indices = @transform_3, window_bounds = array<i64: 1, 1, 128>}]} {
    %c0 = arith.constant 0 : index
    %c0_0 = arith.constant 0 : index
    %0 = vector.load %arg1[%c0, %c0_0] : memref<32x72xbf16, #tpu.memory_space<vmem>>, vector<32x72xbf16>
    %c0_1 = arith.constant 0 : index
    %c0_2 = arith.constant 0 : index
    %1 = vector.load %arg2[%c0_1, %c0_2] : memref<72x128xbf16, #tpu.memory_space<vmem>>, vector<72x128xbf16>
    %cst = arith.constant dense<0.000000e+00> : vector<32x128xf32>
    %2 = tpu.matmul %0, %1, %cst {dimension_numbers = #tpu.dot_dimension_numbers<[1], [0], [0], [1], [0, 0, 1, 1], [], []>} : vector<32x72xbf16>, vector<72x128xbf16>, vector<32x128xf32> -> vector<32x128xf32>
    %cst_3 = arith.constant dense<0.000000e+00> : vector<128xf32>
    %3 = vector.multi_reduction <add>, %2, %cst_3 [0] : vector<32x128xf32> to vector<128xf32>
    %4 = vector.shape_cast %3 : vector<128xf32> to vector<1x128xf32>
    %5 = vector.shape_cast %4 : vector<1x128xf32> to vector<1x1x128xf32>
    %c0_4 = arith.constant 0 : index
    %c0_5 = arith.constant 0 : index
    %c0_6 = arith.constant 0 : index
    %6 = vector.load %arg3[%c0_4, %c0_5, %c0_6] : memref<1x1x128xf32, #tpu.memory_space<vmem>>, vector<1x1x128xf32>
    tpu.vector_store %arg3[%c0_4, %c0_5, %c0_6], %5 {strides = array<i32>} : memref<1x1x128xf32, #tpu.memory_space<vmem>>, vector<1x1x128xf32>,
    %7 = arith.mulf %2, %2 : vector<32x128xf32>
    %cst_7 = arith.constant dense<0.000000e+00> : vector<128xf32>
    %8 = vector.multi_reduction <add>, %7, %cst_7 [0] : vector<32x128xf32> to vector<128xf32>
    %9 = vector.shape_cast %8 : vector<128xf32> to vector<1x128xf32>
    %10 = vector.shape_cast %9 : vector<1x128xf32> to vector<1x1x128xf32>
    %c0_8 = arith.constant 0 : index
    %c0_9 = arith.constant 0 : index
    %c0_10 = arith.constant 0 : index
    %11 = vector.load %arg4[%c0_8, %c0_9, %c0_10] : memref<1x1x128xf32, #tpu.memory_space<vmem>>, vector<1x1x128xf32>
    tpu.vector_store %arg4[%c0_8, %c0_9, %c0_10], %10 {strides = array<i32>} : memref<1x1x128xf32, #tpu.memory_space<vmem>>, vector<1x1x128xf32>,
    return
  }
  func.func @transform_0(%arg0: i32) -> (i32, i32) {
    %c0_i32 = arith.constant 0 : i32
    %c0_i32_0 = arith.constant 0 : i32
    return %arg0, %c0_i32 : i32, i32
  }
  func.func @transform_1(%arg0: i32) -> (i32, i32) {
    %c0_i32 = arith.constant 0 : i32
    %c0_i32_0 = arith.constant 0 : i32
    %c0_i32_1 = arith.constant 0 : i32
    return %c0_i32, %c0_i32_0 : i32, i32
  }
  func.func @transform_2(%arg0: i32) -> (i32, i32, i32) {
    %c0_i32 = arith.constant 0 : i32
    %c0_i32_0 = arith.constant 0 : i32
    %c0_i32_1 = arith.constant 0 : i32
    return %arg0, %c0_i32, %c0_i32_0 : i32, i32, i32
  }
  func.func @transform_3(%arg0: i32) -> (i32, i32, i32) {
    %c0_i32 = arith.constant 0 : i32
    %c0_i32_0 = arith.constant 0 : i32
    %c0_i32_1 = arith.constant 0 : i32
    return %arg0, %c0_i32, %c0_i32_0 : i32, i32, i32
  }
}

module attributes {stable_mosaic.version = 11 : i64} {
  func.func @_conv_bn_relu_kernel(%arg0: i32, %arg1: memref<32x72xbf16, #tpu.memory_space<vmem>>, %arg2: memref<72x128xbf16, #tpu.memory_space<vmem>>, %arg3: memref<1x128xf32, #tpu.memory_space<vmem>>, %arg4: memref<1x128xf32, #tpu.memory_space<vmem>>, %arg5: memref<32x128xf32, #tpu.memory_space<vmem>>) attributes {dimension_semantics = [#tpu.dimension_semantics<parallel>], iteration_bounds = array<i64: 2>, scalar_prefetch = 0 : i64, scratch_operands = 0 : i64, tpu.core_type = #tpu.core_type<tc>, window_params = [{transform_indices = @transform_0, window_bounds = array<i64: 32, 72>}, {pipeline_mode = #tpu.pipeline_mode<synchronous>, transform_indices = @transform_1, window_bounds = array<i64: 72, 128>}, {pipeline_mode = #tpu.pipeline_mode<synchronous>, transform_indices = @transform_2, window_bounds = array<i64: 1, 128>}, {pipeline_mode = #tpu.pipeline_mode<synchronous>, transform_indices = @transform_3, window_bounds = array<i64: 1, 128>}, {transform_indices = @transform_4, window_bounds = array<i64: 32, 128>}]} {
    %c0 = arith.constant 0 : index
    %c0_0 = arith.constant 0 : index
    %0 = vector.load %arg1[%c0, %c0_0] : memref<32x72xbf16, #tpu.memory_space<vmem>>, vector<32x72xbf16>
    %c0_1 = arith.constant 0 : index
    %c0_2 = arith.constant 0 : index
    %1 = vector.load %arg2[%c0_1, %c0_2] : memref<72x128xbf16, #tpu.memory_space<vmem>>, vector<72x128xbf16>
    %cst = arith.constant dense<0.000000e+00> : vector<32x128xf32>
    %2 = tpu.matmul %0, %1, %cst {dimension_numbers = #tpu.dot_dimension_numbers<[1], [0], [0], [1], [0, 0, 1, 1], [], []>} : vector<32x72xbf16>, vector<72x128xbf16>, vector<32x128xf32> -> vector<32x128xf32>
    %c0_3 = arith.constant 0 : index
    %c0_4 = arith.constant 0 : index
    %3 = vector.load %arg3[%c0_3, %c0_4] : memref<1x128xf32, #tpu.memory_space<vmem>>, vector<1x128xf32>
    %4 = vector.broadcast %3 : vector<1x128xf32> to vector<32x128xf32>
    %5 = arith.mulf %2, %4 : vector<32x128xf32>
    %c0_5 = arith.constant 0 : index
    %c0_6 = arith.constant 0 : index
    %6 = vector.load %arg4[%c0_5, %c0_6] : memref<1x128xf32, #tpu.memory_space<vmem>>, vector<1x128xf32>
    %7 = vector.broadcast %6 : vector<1x128xf32> to vector<32x128xf32>
    %8 = arith.addf %5, %7 : vector<32x128xf32>
    %cst_7 = arith.constant 0.000000e+00 : f32
    %9 = vector.broadcast %cst_7 : f32 to vector<32x128xf32>
    %10 = arith.maximumf %8, %9 : vector<32x128xf32>
    %c0_8 = arith.constant 0 : index
    %c0_9 = arith.constant 0 : index
    %11 = vector.load %arg5[%c0_8, %c0_9] : memref<32x128xf32, #tpu.memory_space<vmem>>, vector<32x128xf32>
    tpu.vector_store %arg5[%c0_8, %c0_9], %10 {strides = array<i32>} : memref<32x128xf32, #tpu.memory_space<vmem>>, vector<32x128xf32>,
    return
  }
  func.func @transform_0(%arg0: i32) -> (i32, i32) {
    %c0_i32 = arith.constant 0 : i32
    %c0_i32_0 = arith.constant 0 : i32
    return %arg0, %c0_i32 : i32, i32
  }
  func.func @transform_1(%arg0: i32) -> (i32, i32) {
    %c0_i32 = arith.constant 0 : i32
    %c0_i32_0 = arith.constant 0 : i32
    %c0_i32_1 = arith.constant 0 : i32
    return %c0_i32, %c0_i32_0 : i32, i32
  }
  func.func @transform_2(%arg0: i32) -> (i32, i32) {
    %c0_i32 = arith.constant 0 : i32
    %c0_i32_0 = arith.constant 0 : i32
    %c0_i32_1 = arith.constant 0 : i32
    return %c0_i32, %c0_i32_0 : i32, i32
  }
  func.func @transform_3(%arg0: i32) -> (i32, i32) {
    %c0_i32 = arith.constant 0 : i32
    %c0_i32_0 = arith.constant 0 : i32
    %c0_i32_1 = arith.constant 0 : i32
    return %c0_i32, %c0_i32_0 : i32, i32
  }
  func.func @transform_4(%arg0: i32) -> (i32, i32) {
    %c0_i32 = arith.constant 0 : i32
    %c0_i32_0 = arith.constant 0 : i32
    return %arg0, %c0_i32 : i32, i32
  }
}

</mosaic_0001>

<llo_original>
// kernel: tile.13
$region0: #{tile.13}
  #allocation0 [shape = 's32[1]{0}', space=sflag, size = 0x4, scoped, tag = 'scoped memory for tile.13']
  %s0 = inlined_call_operand.vmem [shape: f32[64], index: 0, kind: input, shape index: {}]
  %s1 = inlined_call_operand.vmem [shape: f32[2,64], index: 1, kind: output, shape index: {}]
  // Predicated region
  $region2: #{tile.13} parent=0 // pred_check
    _
  $region3: #{tile.13} parent=0 // pred_check_branch
    %3 = sbr.rel (0) target = $region5
  $region4: #{tile.13} parent=0 // pred_region
    _
  $region5: #{tile.13} parent=0 // pred_fallthru
    _
  %v4 = vld [vmem:[%s0] ss:$0 sm:$0xff]
  %5 = vst [vmem:[%s1] sm:$0x3] %v4

// kernel: tile.14
$region0: #{tile.14}
  %s0 = inlined_call_operand.vmem [shape: f32[2,64], index: 0, kind: input, shape index: {}]
  %s1 = inlined_call_operand.vmem [shape: f32[1,128], index: 1, kind: output, shape index: {}]
  $region1: #{tile.14} parent=0
    #allocation0 [shape = 'u8[4096]{0}', space=vmem, size = 0x1000, scoped, tag = 'scoped mem for output reshape']
    #allocation1 [shape = 'u8[4096]{0}', space=vmem, size = 0x1000, scoped, tag = 'scoped mem for input reshape']
    %s3 = sshllo.u32 0, 2
    %v4 = vld [vmem:[%s0] sm:%s3]
    %5 = vst [vmem:[#allocation1] sm:%s3] %v4
    %v6 = vld [vmem:[#allocation1] sm:$0x1]
    %vm7 = vcmask 523264
    %8 = vst.msk [vmem:[#allocation0] sm:$0x1] %vm7, %v6
    %s9 = scalar_lea.vmem [#allocation1], 1
    %v10 = vld [vmem:[%s9] sm:$0x1]
    %11 = vrot.lane.b32.xlu0 %v10, 64
    %v12 = vpop.permute.xlu0 %11
    %vm13 = vcmask 1048064
    %14 = vst.msk [vmem:[#allocation0] sm:$0x1] %vm13, %v12
    %s16 = sshllo.u32 0, 1
    %v18 = vld [vmem:[#allocation0] sm:%s16]
    %s19 = sshllo.u32 0, 1
    %20 = vst [vmem:[%s1] sm:%s19] %v18

// kernel: resblock_discriminator_forward.3
$region0: #{resblock_discriminator_forward.3}
  #allocation0 [shape = 'u32[]', space=smem, size = 0x4, offset = 0x4, fixed_abs, tag = 'smem constant byte address 0x4 - core index']
  #allocation1 [shape = 'u32[144,128]{1,0:T(1,128)}', space=vmem, size = 0x12000, scoped, tag = 'internal scratch']
  %s0 = inlined_call_operand.vmem [shape: bf16[64,72], index: 0, kind: input, shape index: {}]
  %s1 = inlined_call_operand.vmem [shape: bf16[72,128], index: 1, kind: input, shape index: {}]
  %s2 = inlined_call_operand.vmem [shape: f32[1,128], index: 2, kind: input, shape index: {}]
  %s3 = inlined_call_operand.vmem [shape: f32[1,128], index: 3, kind: input, shape index: {}]
  %s4 = inlined_call_operand.vmem [shape: f32[64,128], index: 4, kind: output, shape index: {}]
  %s5 = sld [smem:[#allocation0]]
  $region49: #{resblock_discriminator_forward.3} parent=0
    _
  %s7 = ssub.s32 1, %s5
  %s8 = scalar_select 0, %s7, %s5
  loop: start=0, step=1, limit=4
  $region2: #{resblock_discriminator_forward.3} parent=0 // loop_pre_header
    _
  $region3: #{resblock_discriminator_forward.3} parent=0 // loop_header
    %s10 = sphi 0, %s14
    %p11 = scmp.ge.s32.totalorder %s10, 4
    %s20 = sphi 0, %s22
    %s23 = sphi 0, %s20
    %s24 = sphi 0, %s23
    %s40 = sphi 0, %s24
    %s44 = sphi 0, %s44
    %s46 = sphi 0, %s44
    %s47 = sphi 0, %s46
    %s61 = sphi 0, %s47
    %s65 = sphi 0, %s65
    %s67 = sphi 0, %s65
    %s68 = sphi 0, %s67
    %s82 = sphi 0, %s68
    %s86 = sphi 0, %s86
    %s88 = sphi 0, %s86
    %s89 = sphi 0, %s88
    %s103 = sphi 0, %s89
    %s109 = sphi 0, %s111
    %s112 = sphi 0, %s109
    %s113 = sphi 0, %s112
    %s129 = sphi 0, %s113
  $region4: #{resblock_discriminator_forward.3} parent=0 // loop_header_branch
    %13 = sbr.rel (%p11) target = $region8
  $region5: #{resblock_discriminator_forward.3} parent=0 // loop_body
    %s15 = ssub.s32 %s10, 1
    %s16 = ssub.s32 %s10, 2
    %s17 = sadd.s32 %s10, 1
    %s18 = ssub.s32 %s10, %s17
    %p19 = scmp.eq.s32.totalorder %s18, 0
    %s21 = sadd.s32 %s20, 1
    %s22 = scalar_select %p19, %s20, %s21
    %p25 = pneg %p19
    %p26 = scmp.eq.s32.totalorder %s10, 1
    %p27 = por %p25, %p26
    %p28 = scmp.ne.s32.totalorder %s20, %s23
    %p29 = scmp.eq.s32.totalorder %s10, 0
    %p30 = por %p28, %p29
    %p31 = scmp.ne.s32.totalorder %s20, %s23
    %p32 = scmp.eq.s32.totalorder %s15, 1
    %p33 = por %p31, %p32
    %p34 = scmp.ne.s32.totalorder %s23, %s24
    %p35 = scmp.eq.s32.totalorder %s15, 0
    %p36 = por %p34, %p35
    %p37 = scmp.ne.s32.totalorder %s23, %s24
    %p38 = scmp.eq.s32.totalorder %s16, 1
    %p39 = por %p37, %p38
    %p41 = scmp.ne.s32.totalorder %s24, %s40
    %p42 = scmp.eq.s32.totalorder %s16, 0
    %p43 = por %p41, %p42
    %s45 = sadd.s32 %s44, 1
    %p48 = scmp.eq.s32.totalorder %s10, 1
    %p49 = scmp.ne.s32.totalorder %s44, %s46
    %p50 = scmp.eq.s32.totalorder %s10, 0
    %p51 = por %p49, %p50
    %p52 = scmp.ne.s32.totalorder %s44, %s46
    %p53 = scmp.eq.s32.totalorder %s15, 1
    %p54 = por %p52, %p53
    %p55 = scmp.ne.s32.totalorder %s46, %s47
    %p56 = scmp.eq.s32.totalorder %s15, 0
    %p57 = por %p55, %p56
    %p58 = scmp.ne.s32.totalorder %s46, %s47
    %p59 = scmp.eq.s32.totalorder %s16, 1
    %p60 = por %p58, %p59
    %p62 = scmp.ne.s32.totalorder %s47, %s61
    %p63 = scmp.eq.s32.totalorder %s16, 0
    %p64 = por %p62, %p63
    %s66 = sadd.s32 %s65, 1
    %p69 = scmp.eq.s32.totalorder %s10, 1
    %p70 = scmp.ne.s32.totalorder %s65, %s67
    %p71 = scmp.eq.s32.totalorder %s10, 0
    %p72 = por %p70, %p71
    %p73 = scmp.ne.s32.totalorder %s65, %s67
    %p74 = scmp.eq.s32.totalorder %s15, 1
    %p75 = por %p73, %p74
    %p76 = scmp.ne.s32.totalorder %s67, %s68
    %p77 = scmp.eq.s32.totalorder %s15, 0
    %p78 = por %p76, %p77
    %p79 = scmp.ne.s32.totalorder %s67, %s68
    %p80 = scmp.eq.s32.totalorder %s16, 1
    %p81 = por %p79, %p80
    %p83 = scmp.ne.s32.totalorder %s68, %s82
    %p84 = scmp.eq.s32.totalorder %s16, 0
    %p85 = por %p83, %p84
    %s87 = sadd.s32 %s86, 1
    %p90 = scmp.eq.s32.totalorder %s10, 1
    %p91 = scmp.ne.s32.totalorder %s86, %s88
    %p92 = scmp.eq.s32.totalorder %s10, 0
    %p93 = por %p91, %p92
    %p94 = scmp.ne.s32.totalorder %s86, %s88
    %p95 = scmp.eq.s32.totalorder %s15, 1
    %p96 = por %p94, %p95
    %p97 = scmp.ne.s32.totalorder %s88, %s89
    %p98 = scmp.eq.s32.totalorder %s15, 0
    %p99 = por %p97, %p98
    %p100 = scmp.ne.s32.totalorder %s88, %s89
    %p101 = scmp.eq.s32.totalorder %s16, 1
    %p102 = por %p100, %p101
    %p104 = scmp.ne.s32.totalorder %s89, %s103
    %p105 = scmp.eq.s32.totalorder %s16, 0
    %p106 = por %p104, %p105
    %s107 = ssub.s32 %s10, %s17
    %p108 = scmp.eq.s32.totalorder %s107, 0
    %s110 = sadd.s32 %s109, 1
    %s111 = scalar_select %p108, %s109, %s110
    %p114 = pneg %p108
    %p115 = scmp.eq.s32.totalorder %s10, 1
    %p116 = por %p114, %p115
    %p117 = scmp.ne.s32.totalorder %s109, %s112
    %p118 = scmp.eq.s32.totalorder %s10, 0
    %p119 = por %p117, %p118
    %p120 = scmp.ne.s32.totalorder %s109, %s112
    %p121 = scmp.eq.s32.totalorder %s15, 1
    %p122 = por %p120, %p121
    %p123 = scmp.ne.s32.totalorder %s112, %s113
    %p124 = scmp.eq.s32.totalorder %s15, 0
    %p125 = por %p123, %p124
    %p126 = scmp.ne.s32.totalorder %s112, %s113
    %p127 = scmp.eq.s32.totalorder %s16, 1
    %p128 = por %p126, %p127
    %p130 = scmp.ne.s32.totalorder %s113, %s129
    %p131 = scmp.eq.s32.totalorder %s16, 0
    %p132 = por %p130, %p131
    %p133 = scmp.le.s32.totalorder 1, %s10
    %p134 = scmp.lt.s32.totalorder %s10, 3
    %p135 = pnand %p133, %p134
    %p136 = pneg %p135
    // Predicated region
    $region9: #{resblock_discriminator_forward.3} parent=5 // pred_check
      _
    $region10: #{resblock_discriminator_forward.3} parent=5 // pred_check_branch
      %138 = sbr.rel (%p135) target = $region12
    $region11: #{resblock_discriminator_forward.3} parent=5 // pred_region
      %s139 = ssub.s32 %s10, 1
      // Predicated region
      $region13: #{resblock_discriminator_forward.3} parent=11 // pred_check
        %p140 = pneg %p57
      $region14: #{resblock_discriminator_forward.3} parent=11 // pred_check_branch
        %142 = sbr.rel (%p140) target = $region16
      $region15: #{resblock_discriminator_forward.3} parent=11 // pred_region
        _
      $region16: #{resblock_discriminator_forward.3} parent=11 // pred_fallthru
        _
      // Predicated region
      $region17: #{resblock_discriminator_forward.3} parent=11 // pred_check
        %p143 = pneg %p78
      $region18: #{resblock_discriminator_forward.3} parent=11 // pred_check_branch
        %145 = sbr.rel (%p143) target = $region20
      $region19: #{resblock_discriminator_forward.3} parent=11 // pred_region
        _
      $region20: #{resblock_discriminator_forward.3} parent=11 // pred_fallthru
        _
      // Predicated region
      $region21: #{resblock_discriminator_forward.3} parent=11 // pred_check
        %p146 = pneg %p99
      $region22: #{resblock_discriminator_forward.3} parent=11 // pred_check_branch
        %148 = sbr.rel (%p146) target = $region24
      $region23: #{resblock_discriminator_forward.3} parent=11 // pred_region
        _
      $region24: #{resblock_discriminator_forward.3} parent=11 // pred_fallthru
        _
    $region12: #{resblock_discriminator_forward.3} parent=5 // pred_fallthru
      _
    %p149 = scmp.lt.s32.totalorder %s10, 2
    // Predicated region
    $region25: #{resblock_discriminator_forward.3} parent=5 // pred_check
      %p150 = pneg %p149
    $region26: #{resblock_discriminator_forward.3} parent=5 // pred_check_branch
      %152 = sbr.rel (%p150) target = $region28
    $region27: #{resblock_discriminator_forward.3} parent=5 // pred_region
      // Predicated region
      $region29: #{resblock_discriminator_forward.3} parent=27 // pred_check
        %p153 = pneg %p30
      $region30: #{resblock_discriminator_forward.3} parent=27 // pred_check_branch
        %155 = sbr.rel (%p153) target = $region32
      $region31: #{resblock_discriminator_forward.3} parent=27 // pred_region
        %s156 = smul.u32 4, %s10
        %p157 = scmp.lt.s32.totalorder %s156, 7
        %s158 = scalar_select %p157, %s156, 7
        %s159 = smul.addr %s158, 4
        %s160 = scalar_lea.vmem %s0, %s159
        %s161 = smul.u32 4, %s10
      $region32: #{resblock_discriminator_forward.3} parent=27 // pred_fallthru
        _
    $region28: #{resblock_discriminator_forward.3} parent=5 // pred_fallthru
      _
    %p162 = scmp.le.s32.totalorder 1, %s10
    %p163 = scmp.lt.s32.totalorder %s10, 3
    %p164 = pnand %p162, %p163
    %p165 = pneg %p164
    // Predicated region
    $region33: #{resblock_discriminator_forward.3} parent=5 // pred_check
      _
    $region34: #{resblock_discriminator_forward.3} parent=5 // pred_check_branch
      %167 = sbr.rel (%p164) target = $region36
    $region35: #{resblock_discriminator_forward.3} parent=5 // pred_region
      %s168 = ssub.s32 %s10, 1
      %s169 = smul.u32 4, %s15
      %p170 = scmp.lt.s32.totalorder %s169, 7
      %s171 = scalar_select %p170, %s169, 7
      %s172 = smul.addr %s171, 4
      %s173 = scalar_lea.vmem %s0, %s172
      %p174 = pneg %p36
      %p175 = pneg %p33
      %p176 = pneg %p57
      %p177 = pneg %p54
      %p178 = pneg %p78
      %p179 = pneg %p75
      %p180 = pneg %p99
      %p181 = pneg %p96
      %p182 = pneg %p125
      %p183 = pneg %p122
      %s184 = smul.u32 4, %s15
      %p185 = scmp.lt.s32.totalorder %s184, 7
      %s186 = scalar_select %p185, %s184, 7
      %s187 = smul.addr %s186, 8
      %s188 = scalar_lea.vmem %s4, %s187
      %s189 = smul.u32 4, %s15
      %p190 = scmp.lt.s32.totalorder %s189, 7
      %s191 = scalar_select %p190, %s189, 7
      %s192 = smul.addr %s191, 4
      %s193 = scalar_lea.vmem %s0, %s192
      %s194 = smul.u32 4, %s15
      %s195 = smul.u32 4, %s15
      %p196 = scmp.lt.s32.totalorder %s195, 7
      %s197 = scalar_select %p196, %s195, 7
      %s198 = smul.addr %s197, 8
      %s199 = scalar_lea.vmem %s4, %s198
      %s200 = smul.u32 4, %s15
      %v202 = vld [vmem:[%s193] sm:$0xf]
      %v203 = vld [vmem:[%s193 + $0x4] sm:$0xf]
      %v204 = vld [vmem:[%s193 + $0x8] sm:$0xf]
      %v205 = vld [vmem:[%s193 + $0xc] sm:$0xf]
      %v206 = vld [vmem:[%s1] sm:$0xf]
      %v207 = vld [vmem:[%s1 + $0x4] sm:$0xf]
      %v208 = vld [vmem:[%s1 + $0x8] sm:$0xf]
      %v209 = vld [vmem:[%s1 + $0xc] sm:$0xf]
      %v210 = vld [vmem:[%s1 + $0x10] sm:$0xf]
      %v211 = vld [vmem:[%s1 + $0x14] sm:$0xf]
      %v212 = vld [vmem:[%s1 + $0x18] sm:$0xf]
      %v213 = vld [vmem:[%s1 + $0x1c] sm:$0xf]
      %v214 = vld [vmem:[%s1 + $0x20] sm:$0xf]
      %v219 = vunpack.c.l.b16 %v202
      %v220 = vunpack.c.l.b16 %v203
      %v221 = vunpack.c.l.b16 %v204
      %v222 = vunpack.c.l.b16 %v205
      %v223 = vpack.c.b16 %v220, %v219
      %v224 = vpack.c.b16 %v222, %v221
      %v234 = vunpack.c.l.b16 %v206
      %v235 = vunpack.c.l.b16 %v207
      %v236 = vunpack.c.l.b16 %v208
      %v237 = vunpack.c.l.b16 %v209
      %v238 = vunpack.c.l.b16 %v210
      %v239 = vunpack.c.l.b16 %v211
      %v240 = vunpack.c.l.b16 %v212
      %v241 = vunpack.c.l.b16 %v213
      %v242 = vunpack.c.l.b16 %v214
      %v243 = vpack.c.b16 %v235, %v234
      %v244 = vpack.c.b16 %v237, %v236
      %v245 = vpack.c.b16 %v239, %v238
      %v246 = vpack.c.b16 %v241, %v240
      %v247 = vpack.c.b16 %v242, %v242
      %vm252 = vcmask 588800
      %v254 = vsel %vm252, %v223, 0
      %v257 = vsel %vm252, %v224, 0
      %vm259 = vcmask 1043456
      %v261 = vsel %vm259, %v247, 0
      %263 = vmatprep.subr.bf16.mxu0 0
      %264 = vmatpush1.bf16.msra.mxu0 %v243
      %265 = vmatprep.subr.bf16.mxu0 0
      %266 = vmatpush1.bf16.msra.mxu0 %v244
      %267 = vmatprep.subr.bf16.mxu0 0
      %268 = vmatpush1.bf16.msra.mxu0 %v245
      %269 = vmatprep.subr.bf16.mxu0 0
      %270 = vmatpush1.bf16.msra.mxu0 %v246
      %271 = vmatprep.subr.bf16.mxu0 0
      %272 = vmatpush1.bf16.msra.mxu0 %v261
      %273 = vmatprep.subr.bf16.mxu0 0
      %274 = vmatpush1.bf16.msra.mxu0 0
      %275 = vmatprep.subr.bf16.mxu0 0
      %276 = vmatpush1.bf16.msra.mxu0 0
      %277 = vmatprep.subr.bf16.mxu0 0
      %278 = vmatpush1.bf16.msra.mxu0 0
      %279 = vmatprep.subr.bf16.mxu0 0
      %280 = vmatpush1.bf16.msra.mxu0 0
      %281 = vmatprep.subr.bf16.mxu0 0
      %282 = vmatpush1.bf16.msra.mxu0 0
      %283 = vmatprep.subr.bf16.mxu0 0
      %284 = vmatpush1.bf16.msra.mxu0 0
      %285 = vmatprep.subr.bf16.mxu0 0
      %286 = vmatpush1.bf16.msra.mxu0 0
      %287 = vmatprep.subr.bf16.mxu0 0
      %288 = vmatpush1.bf16.msra.mxu0 0
      %289 = vmatprep.subr.bf16.mxu0 0
      %290 = vmatpush1.bf16.msra.mxu0 0
      %291 = vmatprep.subr.bf16.mxu0 0
      %292 = vmatpush1.bf16.msra.mxu0 0
      %293 = vmatprep.subr.bf16.mxu0 0
      %294 = vmatpush1.bf16.msra.mxu0 0
      %295 = vmatprep.mubr.bf16.mxu0 0
      %296 = vmatmul.mubr.bf16.gmra.mrb[0].mxu0 %v254
      %v297 = vpop.f32.mrb[0].mxu0
      %v298 = vadd.f32 0.0, %v297
      %v299 = vpop.f32.mrb[0].mxu0
      %v300 = vpop.f32.mrb[0].mxu0
      %v301 = vadd.f32 0.0, %v300
      %v302 = vpop.f32.mrb[0].mxu0
      %303 = vmatprep.mubr.bf16.mxu0 0
      %304 = vmatmul.mubr.bf16.gmra.mrb[0].mxu0 %v257
      %v305 = vpop.f32.mrb[0].mxu0
      %v306 = vadd.f32 0.0, %v305
      %v307 = vpop.f32.mrb[0].mxu0
      %v308 = vpop.f32.mrb[0].mxu0
      %v309 = vadd.f32 0.0, %v308
      %v310 = vpop.f32.mrb[0].mxu0
      %311 = vdwg.mxu0
      %v312 = vld [vmem:[%s2] sm:$0x1]
      %v314 = vlaneseq
      %v315 = vshrl.u32 %v314, 7
      %v316 = vsub.s32 0, %v315
      %v317 = vrot.slane %v312, %v316
      %v319 = vmul.f32 %v298, %v317
      %v320 = vmul.f32 %v301, %v317
      %v321 = vmul.f32 %v306, %v317
      %v322 = vmul.f32 %v309, %v317
      %v323 = vld [vmem:[%s3] sm:$0x1]
      %v325 = vlaneseq
      %v326 = vshrl.u32 %v325, 7
      %v327 = vsub.s32 0, %v326
      %v328 = vrot.slane %v323, %v327
      %v330 = vadd.f32 %v319, %v328
      %v331 = vadd.f32 %v320, %v328
      %v332 = vadd.f32 %v321, %v328
      %v333 = vadd.f32 %v322, %v328
      %v334 = vmax.f32 %v330, 0.0
      %v335 = vmax.f32 %v331, 0.0
      %v336 = vmax.f32 %v332, 0.0
      %v337 = vmax.f32 %v333, 0.0
      %338 = vst [vmem:[%s199] sm:$0xff] %v334
      %339 = vst [vmem:[%s199 + $0x8] sm:$0xff] %v335
      %340 = vst [vmem:[%s199 + $0x10] sm:$0xff] %v336
      %341 = vst [vmem:[%s199 + $0x18] sm:$0xff] %v337
      %s342 = smul.u32 4, %s15
      %p343 = scmp.lt.s32.totalorder %s342, 7
      %s344 = scalar_select %p343, %s342, 7
      %s345 = smul.addr %s344, 8
      %s346 = scalar_lea.vmem %s4, %s345
      // Predicated region
      $region37: #{resblock_discriminator_forward.3} parent=35 // pred_check
        %p347 = pneg %p122
      $region38: #{resblock_discriminator_forward.3} parent=35 // pred_check_branch
        %349 = sbr.rel (%p347) target = $region40
      $region39: #{resblock_discriminator_forward.3} parent=35 // pred_region
        %s350 = smul.u32 4, %s15
      $region40: #{resblock_discriminator_forward.3} parent=35 // pred_fallthru
        _
    $region36: #{resblock_discriminator_forward.3} parent=5 // pred_fallthru
      _
    %p351 = scmp.le.s32.totalorder 2, %s10
    // Predicated region
    $region41: #{resblock_discriminator_forward.3} parent=5 // pred_check
      %p352 = pneg %p351
    $region42: #{resblock_discriminator_forward.3} parent=5 // pred_check_branch
      %354 = sbr.rel (%p352) target = $region44
    $region43: #{resblock_discriminator_forward.3} parent=5 // pred_region
      %s355 = ssub.s32 %s10, 2
      // Predicated region
      $region45: #{resblock_discriminator_forward.3} parent=43 // pred_check
        %p356 = pneg %p128
      $region46: #{resblock_discriminator_forward.3} parent=43 // pred_check_branch
        %358 = sbr.rel (%p356) target = $region48
      $region47: #{resblock_discriminator_forward.3} parent=43 // pred_region
        %s359 = smul.u32 4, %s16
        %p360 = scmp.lt.s32.totalorder %s359, 7
        %s361 = scalar_select %p360, %s359, 7
        %s362 = smul.addr %s361, 8
        %s363 = scalar_lea.vmem %s4, %s362
      $region48: #{resblock_discriminator_forward.3} parent=43 // pred_fallthru
        _
    $region44: #{resblock_discriminator_forward.3} parent=5 // pred_fallthru
      _
  $region6: #{resblock_discriminator_forward.3} parent=0 // loop_footer
    %s14 = sadd.s32 1, %s10
  $region7: #{resblock_discriminator_forward.3} parent=0 // loop_footer_branch
    %9 = sbr.rel target = $region3
  $region8: #{resblock_discriminator_forward.3} parent=0 // loop_exit
    _

// kernel: resblock_discriminator_forward.2
$region0: #{resblock_discriminator_forward.2}
  #allocation0 [shape = 'u32[]', space=smem, size = 0x4, offset = 0x4, fixed_abs, tag = 'smem constant byte address 0x4 - core index']
  #allocation1 [shape = 'u32[144,128]{1,0:T(1,128)}', space=vmem, size = 0x12000, scoped, tag = 'internal scratch']
  %s0 = inlined_call_operand.vmem [shape: bf16[64,72], index: 0, kind: input, shape index: {}]
  %s1 = inlined_call_operand.vmem [shape: bf16[72,128], index: 1, kind: input, shape index: {}]
  %s2 = inlined_call_operand.vmem [shape: f32[2,1,128], index: 2, kind: output, shape index: {0}]
  %s3 = inlined_call_operand.vmem [shape: f32[2,1,128], index: 3, kind: output, shape index: {1}]
  %4 = xla_tuple %s2, %s3
  %s5 = sld [smem:[#allocation0]]
  $region49: #{resblock_discriminator_forward.2} parent=0
    _
  %s7 = ssub.s32 1, %s5
  %s8 = scalar_select 0, %s7, %s5
  loop: start=0, step=1, limit=4
  $region2: #{resblock_discriminator_forward.2} parent=0 // loop_pre_header
    _
  $region3: #{resblock_discriminator_forward.2} parent=0 // loop_header
    %s10 = sphi 0, %s14
    %p11 = scmp.ge.s32.totalorder %s10, 4
    %s20 = sphi 0, %s22
    %s23 = sphi 0, %s20
    %s24 = sphi 0, %s23
    %s40 = sphi 0, %s24
    %s44 = sphi 0, %s44
    %s46 = sphi 0, %s44
    %s47 = sphi 0, %s46
    %s61 = sphi 0, %s47
    %s67 = sphi 0, %s69
    %s70 = sphi 0, %s67
    %s71 = sphi 0, %s70
    %s87 = sphi 0, %s71
    %s93 = sphi 0, %s95
    %s96 = sphi 0, %s93
    %s97 = sphi 0, %s96
    %s113 = sphi 0, %s97
  $region4: #{resblock_discriminator_forward.2} parent=0 // loop_header_branch
    %13 = sbr.rel (%p11) target = $region8
  $region5: #{resblock_discriminator_forward.2} parent=0 // loop_body
    %s15 = ssub.s32 %s10, 1
    %s16 = ssub.s32 %s10, 2
    %s17 = sadd.s32 %s10, 1
    %s18 = ssub.s32 %s10, %s17
    %p19 = scmp.eq.s32.totalorder %s18, 0
    %s21 = sadd.s32 %s20, 1
    %s22 = scalar_select %p19, %s20, %s21
    %p25 = pneg %p19
    %p26 = scmp.eq.s32.totalorder %s10, 1
    %p27 = por %p25, %p26
    %p28 = scmp.ne.s32.totalorder %s20, %s23
    %p29 = scmp.eq.s32.totalorder %s10, 0
    %p30 = por %p28, %p29
    %p31 = scmp.ne.s32.totalorder %s20, %s23
    %p32 = scmp.eq.s32.totalorder %s15, 1
    %p33 = por %p31, %p32
    %p34 = scmp.ne.s32.totalorder %s23, %s24
    %p35 = scmp.eq.s32.totalorder %s15, 0
    %p36 = por %p34, %p35
    %p37 = scmp.ne.s32.totalorder %s23, %s24
    %p38 = scmp.eq.s32.totalorder %s16, 1
    %p39 = por %p37, %p38
    %p41 = scmp.ne.s32.totalorder %s24, %s40
    %p42 = scmp.eq.s32.totalorder %s16, 0
    %p43 = por %p41, %p42
    %s45 = sadd.s32 %s44, 1
    %p48 = scmp.eq.s32.totalorder %s10, 1
    %p49 = scmp.ne.s32.totalorder %s44, %s46
    %p50 = scmp.eq.s32.totalorder %s10, 0
    %p51 = por %p49, %p50
    %p52 = scmp.ne.s32.totalorder %s44, %s46
    %p53 = scmp.eq.s32.totalorder %s15, 1
    %p54 = por %p52, %p53
    %p55 = scmp.ne.s32.totalorder %s46, %s47
    %p56 = scmp.eq.s32.totalorder %s15, 0
    %p57 = por %p55, %p56
    %p58 = scmp.ne.s32.totalorder %s46, %s47
    %p59 = scmp.eq.s32.totalorder %s16, 1
    %p60 = por %p58, %p59
    %p62 = scmp.ne.s32.totalorder %s47, %s61
    %p63 = scmp.eq.s32.totalorder %s16, 0
    %p64 = por %p62, %p63
    %s65 = ssub.s32 %s10, %s17
    %p66 = scmp.eq.s32.totalorder %s65, 0
    %s68 = sadd.s32 %s67, 1
    %s69 = scalar_select %p66, %s67, %s68
    %p72 = pneg %p66
    %p73 = scmp.eq.s32.totalorder %s10, 1
    %p74 = por %p72, %p73
    %p75 = scmp.ne.s32.totalorder %s67, %s70
    %p76 = scmp.eq.s32.totalorder %s10, 0
    %p77 = por %p75, %p76
    %p78 = scmp.ne.s32.totalorder %s67, %s70
    %p79 = scmp.eq.s32.totalorder %s15, 1
    %p80 = por %p78, %p79
    %p81 = scmp.ne.s32.totalorder %s70, %s71
    %p82 = scmp.eq.s32.totalorder %s15, 0
    %p83 = por %p81, %p82
    %p84 = scmp.ne.s32.totalorder %s70, %s71
    %p85 = scmp.eq.s32.totalorder %s16, 1
    %p86 = por %p84, %p85
    %p88 = scmp.ne.s32.totalorder %s71, %s87
    %p89 = scmp.eq.s32.totalorder %s16, 0
    %p90 = por %p88, %p89
    %s91 = ssub.s32 %s10, %s17
    %p92 = scmp.eq.s32.totalorder %s91, 0
    %s94 = sadd.s32 %s93, 1
    %s95 = scalar_select %p92, %s93, %s94
    %p98 = pneg %p92
    %p99 = scmp.eq.s32.totalorder %s10, 1
    %p100 = por %p98, %p99
    %p101 = scmp.ne.s32.totalorder %s93, %s96
    %p102 = scmp.eq.s32.totalorder %s10, 0
    %p103 = por %p101, %p102
    %p104 = scmp.ne.s32.totalorder %s93, %s96
    %p105 = scmp.eq.s32.totalorder %s15, 1
    %p106 = por %p104, %p105
    %p107 = scmp.ne.s32.totalorder %s96, %s97
    %p108 = scmp.eq.s32.totalorder %s15, 0
    %p109 = por %p107, %p108
    %p110 = scmp.ne.s32.totalorder %s96, %s97
    %p111 = scmp.eq.s32.totalorder %s16, 1
    %p112 = por %p110, %p111
    %p114 = scmp.ne.s32.totalorder %s97, %s113
    %p115 = scmp.eq.s32.totalorder %s16, 0
    %p116 = por %p114, %p115
    %p117 = scmp.le.s32.totalorder 1, %s10
    %p118 = scmp.lt.s32.totalorder %s10, 3
    %p119 = pnand %p117, %p118
    %p120 = pneg %p119
    // Predicated region
    $region9: #{resblock_discriminator_forward.2} parent=5 // pred_check
      _
    $region10: #{resblock_discriminator_forward.2} parent=5 // pred_check_branch
      %122 = sbr.rel (%p119) target = $region12
    $region11: #{resblock_discriminator_forward.2} parent=5 // pred_region
      %s123 = ssub.s32 %s10, 1
      // Predicated region
      $region13: #{resblock_discriminator_forward.2} parent=11 // pred_check
        %p124 = pneg %p57
      $region14: #{resblock_discriminator_forward.2} parent=11 // pred_check_branch
        %126 = sbr.rel (%p124) target = $region16
      $region15: #{resblock_discriminator_forward.2} parent=11 // pred_region
        _
      $region16: #{resblock_discriminator_forward.2} parent=11 // pred_fallthru
        _
    $region12: #{resblock_discriminator_forward.2} parent=5 // pred_fallthru
      _
    %p127 = scmp.lt.s32.totalorder %s10, 2
    // Predicated region
    $region17: #{resblock_discriminator_forward.2} parent=5 // pred_check
      %p128 = pneg %p127
    $region18: #{resblock_discriminator_forward.2} parent=5 // pred_check_branch
      %130 = sbr.rel (%p128) target = $region20
    $region19: #{resblock_discriminator_forward.2} parent=5 // pred_region
      // Predicated region
      $region21: #{resblock_discriminator_forward.2} parent=19 // pred_check
        %p131 = pneg %p30
      $region22: #{resblock_discriminator_forward.2} parent=19 // pred_check_branch
        %133 = sbr.rel (%p131) target = $region24
      $region23: #{resblock_discriminator_forward.2} parent=19 // pred_region
        %s134 = smul.u32 4, %s10
        %p135 = scmp.lt.s32.totalorder %s134, 7
        %s136 = scalar_select %p135, %s134, 7
        %s137 = smul.addr %s136, 4
        %s138 = scalar_lea.vmem %s0, %s137
        %s139 = smul.u32 4, %s10
      $region24: #{resblock_discriminator_forward.2} parent=19 // pred_fallthru
        _
    $region20: #{resblock_discriminator_forward.2} parent=5 // pred_fallthru
      _
    %p140 = scmp.le.s32.totalorder 1, %s10
    %p141 = scmp.lt.s32.totalorder %s10, 3
    %p142 = pnand %p140, %p141
    %p143 = pneg %p142
    // Predicated region
    $region25: #{resblock_discriminator_forward.2} parent=5 // pred_check
      _
    $region26: #{resblock_discriminator_forward.2} parent=5 // pred_check_branch
      %145 = sbr.rel (%p142) target = $region28
    $region27: #{resblock_discriminator_forward.2} parent=5 // pred_region
      %s146 = ssub.s32 %s10, 1
      %s147 = smul.u32 4, %s15
      %p148 = scmp.lt.s32.totalorder %s147, 7
      %s149 = scalar_select %p148, %s147, 7
      %s150 = smul.addr %s149, 4
      %s151 = scalar_lea.vmem %s0, %s150
      %p152 = pneg %p36
      %p153 = pneg %p33
      %p154 = pneg %p57
      %p155 = pneg %p54
      %p156 = pneg %p83
      %p157 = pneg %p80
      %p158 = scmp.lt.s32.totalorder %s15, 1
      %s159 = scalar_select %p158, %s15, 1
      %s160 = scalar_lea.vmem %s2, %s159
      %p161 = pneg %p109
      %p162 = pneg %p106
      %p163 = scmp.lt.s32.totalorder %s15, 1
      %s164 = scalar_select %p163, %s15, 1
      %s165 = scalar_lea.vmem %s3, %s164
      %s166 = smul.u32 4, %s15
      %p167 = scmp.lt.s32.totalorder %s166, 7
      %s168 = scalar_select %p167, %s166, 7
      %s169 = smul.addr %s168, 4
      %s170 = scalar_lea.vmem %s0, %s169
      %s171 = smul.u32 4, %s15
      %p172 = scmp.lt.s32.totalorder %s15, 1
      %s173 = scalar_select %p172, %s15, 1
      %s174 = scalar_lea.vmem %s2, %s173
      %p175 = scmp.lt.s32.totalorder %s15, 1
      %s176 = scalar_select %p175, %s15, 1
      %s177 = scalar_lea.vmem %s3, %s176
      %v179 = vld [vmem:[%s170] sm:$0xf]
      %v180 = vld [vmem:[%s170 + $0x4] sm:$0xf]
      %v181 = vld [vmem:[%s170 + $0x8] sm:$0xf]
      %v182 = vld [vmem:[%s170 + $0xc] sm:$0xf]
      %v183 = vld [vmem:[%s1] sm:$0xf]
      %v184 = vld [vmem:[%s1 + $0x4] sm:$0xf]
      %v185 = vld [vmem:[%s1 + $0x8] sm:$0xf]
      %v186 = vld [vmem:[%s1 + $0xc] sm:$0xf]
      %v187 = vld [vmem:[%s1 + $0x10] sm:$0xf]
      %v188 = vld [vmem:[%s1 + $0x14] sm:$0xf]
      %v189 = vld [vmem:[%s1 + $0x18] sm:$0xf]
      %v190 = vld [vmem:[%s1 + $0x1c] sm:$0xf]
      %v191 = vld [vmem:[%s1 + $0x20] sm:$0xf]
      %v196 = vunpack.c.l.b16 %v179
      %v197 = vunpack.c.l.b16 %v180
      %v198 = vunpack.c.l.b16 %v181
      %v199 = vunpack.c.l.b16 %v182
      %v200 = vpack.c.b16 %v197, %v196
      %v201 = vpack.c.b16 %v199, %v198
      %v211 = vunpack.c.l.b16 %v183
      %v212 = vunpack.c.l.b16 %v184
      %v213 = vunpack.c.l.b16 %v185
      %v214 = vunpack.c.l.b16 %v186
      %v215 = vunpack.c.l.b16 %v187
      %v216 = vunpack.c.l.b16 %v188
      %v217 = vunpack.c.l.b16 %v189
      %v218 = vunpack.c.l.b16 %v190
      %v219 = vunpack.c.l.b16 %v191
      %v220 = vpack.c.b16 %v212, %v211
      %v221 = vpack.c.b16 %v214, %v213
      %v222 = vpack.c.b16 %v216, %v215
      %v223 = vpack.c.b16 %v218, %v217
      %v224 = vpack.c.b16 %v219, %v219
      %vm229 = vcmask 588800
      %v231 = vsel %vm229, %v200, 0
      %v234 = vsel %vm229, %v201, 0
      %vm236 = vcmask 1043456
      %v238 = vsel %vm236, %v224, 0
      %240 = vmatprep.subr.bf16.mxu0 0
      %241 = vmatpush1.bf16.msra.mxu0 %v220
      %242 = vmatprep.subr.bf16.mxu0 0
      %243 = vmatpush1.bf16.msra.mxu0 %v221
      %244 = vmatprep.subr.bf16.mxu0 0
      %245 = vmatpush1.bf16.msra.mxu0 %v222
      %246 = vmatprep.subr.bf16.mxu0 0
      %247 = vmatpush1.bf16.msra.mxu0 %v223
      %248 = vmatprep.subr.bf16.mxu0 0
      %249 = vmatpush1.bf16.msra.mxu0 %v238
      %250 = vmatprep.subr.bf16.mxu0 0
      %251 = vmatpush1.bf16.msra.mxu0 0
      %252 = vmatprep.subr.bf16.mxu0 0
      %253 = vmatpush1.bf16.msra.mxu0 0
      %254 = vmatprep.subr.bf16.mxu0 0
      %255 = vmatpush1.bf16.msra.mxu0 0
      %256 = vmatprep.subr.bf16.mxu0 0
      %257 = vmatpush1.bf16.msra.mxu0 0
      %258 = vmatprep.subr.bf16.mxu0 0
      %259 = vmatpush1.bf16.msra.mxu0 0
      %260 = vmatprep.subr.bf16.mxu0 0
      %261 = vmatpush1.bf16.msra.mxu0 0
      %262 = vmatprep.subr.bf16.mxu0 0
      %263 = vmatpush1.bf16.msra.mxu0 0
      %264 = vmatprep.subr.bf16.mxu0 0
      %265 = vmatpush1.bf16.msra.mxu0 0
      %266 = vmatprep.subr.bf16.mxu0 0
      %267 = vmatpush1.bf16.msra.mxu0 0
      %268 = vmatprep.subr.bf16.mxu0 0
      %269 = vmatpush1.bf16.msra.mxu0 0
      %270 = vmatprep.subr.bf16.mxu0 0
      %271 = vmatpush1.bf16.msra.mxu0 0
      %272 = vmatprep.mubr.bf16.mxu0 0
      %273 = vmatmul.mubr.bf16.gmra.mrb[0].mxu0 %v231
      %v274 = vpop.f32.mrb[0].mxu0
      %v275 = vadd.f32 0.0, %v274
      %v276 = vpop.f32.mrb[0].mxu0
      %v277 = vpop.f32.mrb[0].mxu0
      %v278 = vadd.f32 0.0, %v277
      %v279 = vpop.f32.mrb[0].mxu0
      %280 = vmatprep.mubr.bf16.mxu0 0
      %281 = vmatmul.mubr.bf16.gmra.mrb[0].mxu0 %v234
      %v282 = vpop.f32.mrb[0].mxu0
      %v283 = vadd.f32 0.0, %v282
      %v284 = vpop.f32.mrb[0].mxu0
      %v285 = vpop.f32.mrb[0].mxu0
      %v286 = vadd.f32 0.0, %v285
      %v287 = vpop.f32.mrb[0].mxu0
      %288 = vdwg.mxu0
      %v289 = vadd.f32 %v275, %v278
      %v290 = vadd.f32 %v289, %v283
      %v291 = vadd.f32 %v290, %v286
      %v292 = vrot.slane %v291, 4
      %v293 = vadd.f32 %v291, %v292
      %v294 = vrot.slane %v293, 2
      %v295 = vadd.f32 %v293, %v294
      %v296 = vrot.slane %v295, 1
      %v297 = vadd.f32 %v295, %v296
      %298 = vst [vmem:[%s174] sm:$0x1] %v297
      %v299 = vmul.f32 %v275, %v275
      %v300 = vmul.f32 %v278, %v278
      %v301 = vmul.f32 %v283, %v283
      %v302 = vmul.f32 %v286, %v286
      %v303 = vadd.f32 %v299, %v300
      %v304 = vadd.f32 %v303, %v301
      %v305 = vadd.f32 %v304, %v302
      %v306 = vrot.slane %v305, 4
      %v307 = vadd.f32 %v305, %v306
      %v308 = vrot.slane %v307, 2
      %v309 = vadd.f32 %v307, %v308
      %v310 = vrot.slane %v309, 1
      %v311 = vadd.f32 %v309, %v310
      %312 = vst [vmem:[%s177] sm:$0x1] %v311
      %p313 = scmp.lt.s32.totalorder %s15, 1
      %s314 = scalar_select %p313, %s15, 1
      %s315 = scalar_lea.vmem %s2, %s314
      %p316 = scmp.lt.s32.totalorder %s15, 1
      %s317 = scalar_select %p316, %s15, 1
      %s318 = scalar_lea.vmem %s3, %s317
      // Predicated region
      $region29: #{resblock_discriminator_forward.2} parent=27 // pred_check
        %p319 = pneg %p80
      $region30: #{resblock_discriminator_forward.2} parent=27 // pred_check_branch
        %321 = sbr.rel (%p319) target = $region32
      $region31: #{resblock_discriminator_forward.2} parent=27 // pred_region
        _
      $region32: #{resblock_discriminator_forward.2} parent=27 // pred_fallthru
        _
      // Predicated region
      $region33: #{resblock_discriminator_forward.2} parent=27 // pred_check
        %p322 = pneg %p106
      $region34: #{resblock_discriminator_forward.2} parent=27 // pred_check_branch
        %324 = sbr.rel (%p322) target = $region36
      $region35: #{resblock_discriminator_forward.2} parent=27 // pred_region
        _
      $region36: #{resblock_discriminator_forward.2} parent=27 // pred_fallthru
        _
    $region28: #{resblock_discriminator_forward.2} parent=5 // pred_fallthru
      _
    %p325 = scmp.le.s32.totalorder 2, %s10
    // Predicated region
    $region37: #{resblock_discriminator_forward.2} parent=5 // pred_check
      %p326 = pneg %p325
    $region38: #{resblock_discriminator_forward.2} parent=5 // pred_check_branch
      %328 = sbr.rel (%p326) target = $region40
    $region39: #{resblock_discriminator_forward.2} parent=5 // pred_region
      %s329 = ssub.s32 %s10, 2
      // Predicated region
      $region41: #{resblock_discriminator_forward.2} parent=39 // pred_check
        %p330 = pneg %p86
      $region42: #{resblock_discriminator_forward.2} parent=39 // pred_check_branch
        %332 = sbr.rel (%p330) target = $region44
      $region43: #{resblock_discriminator_forward.2} parent=39 // pred_region
        %p333 = scmp.lt.s32.totalorder %s16, 1
        %s334 = scalar_select %p333, %s16, 1
        %s335 = scalar_lea.vmem %s2, %s334
      $region44: #{resblock_discriminator_forward.2} parent=39 // pred_fallthru
        _
      // Predicated region
      $region45: #{resblock_discriminator_forward.2} parent=39 // pred_check
        %p336 = pneg %p112
      $region46: #{resblock_discriminator_forward.2} parent=39 // pred_check_branch
        %338 = sbr.rel (%p336) target = $region48
      $region47: #{resblock_discriminator_forward.2} parent=39 // pred_region
        %p339 = scmp.lt.s32.totalorder %s16, 1
        %s340 = scalar_select %p339, %s16, 1
        %s341 = scalar_lea.vmem %s3, %s340
      $region48: #{resblock_discriminator_forward.2} parent=39 // pred_fallthru
        _
    $region40: #{resblock_discriminator_forward.2} parent=5 // pred_fallthru
      _
  $region6: #{resblock_discriminator_forward.2} parent=0 // loop_footer
    %s14 = sadd.s32 1, %s10
  $region7: #{resblock_discriminator_forward.2} parent=0 // loop_footer_branch
    %9 = sbr.rel target = $region3
  $region8: #{resblock_discriminator_forward.2} parent=0 // loop_exit
    _

</llo_original>
